<compile_context>
chip_gen: v7x
topology: tpu7x:2x2x1
jax: 0.10.0
libtpu: 0.0.40
codegen_flags: <defaults>
</compile_context>

<pallas_src>
import functools

import jax
import jax.numpy as jnp
from jax.experimental import pallas as pl
from jax.experimental.pallas import tpu as pltpu


def _lstm_kernel(x_ref, wih_ref, whh_ref, b_ref, h0_ref, c0_ref,
                 wlin_ref, blin_ref,
                 logp_ref, hn_ref, cn_ref):
    """Single-layer LSTM over the full sequence + Linear + LogSoftmax.

    x_ref    : (S, I)      input sequence (batch=1 squeezed)
    wih_ref  : (I, 4H)     transposed weight_ih_l0
    whh_ref  : (H, 4H)     transposed weight_hh_l0
    b_ref    : (1, 4H)     bias_ih_l0 + bias_hh_l0
    h0_ref   : (1, H)      initial hidden state
    c0_ref   : (1, H)      initial cell state
    wlin_ref : (H, O)      transposed linear weight
    blin_ref : (1, O)      linear bias
    logp_ref : (1, O)      log-softmax output
    hn_ref   : (1, H)      final hidden state
    cn_ref   : (1, H)      final cell state
    """
    seq_len = x_ref.shape[0]            # static Python int
    hidden = h0_ref.shape[1]

    w_hh = whh_ref[...]                 # (H, 4H), loaded once

    # Hoisted input projection: one (S, I) @ (I, 4H) matmul, bias folded in.
    # (S, 4H) = (8, 128) -> a single f32 vreg tile at these sizes.
    xw = (jnp.dot(x_ref[...], wih_ref[...],
                  preferred_element_type=jnp.float32)
          + b_ref[...])                 # (S, 4H), gate order i|f|g|o

    h = h0_ref[...]                     # (1, H)
    c = c0_ref[...]                     # (1, H)

    # Fully unrolled recurrence (seq_len is small and static) — only the
    # (1, H) @ (H, 4H) recurrent matmul remains on the serial path.
    for t in range(seq_len):
        gates = xw[t:t + 1, :] + jnp.dot(
            h, w_hh, preferred_element_type=jnp.float32)          # (1, 4H)

        # Two full-width EUP passes instead of four narrow sliced ones.
        sg = jax.nn.sigmoid(gates)      # covers i | f | o
        tg = jnp.tanh(gates)            # covers g

        i_g = sg[:, 0 * hidden:1 * hidden]
        f_g = sg[:, 1 * hidden:2 * hidden]
        g_g = tg[:, 2 * hidden:3 * hidden]
        o_g = sg[:, 3 * hidden:4 * hidden]

        c = f_g * c + i_g * g_g
        h = o_g * jnp.tanh(c)

    hn_ref[...] = h
    cn_ref[...] = c

    # Linear + LogSoftmax on the last hidden state (rr[-1]).
    logits = (jnp.dot(h, wlin_ref[...], preferred_element_type=jnp.float32)
              + blin_ref[...])                                     # (1, O)
    m = jnp.max(logits, axis=-1, keepdims=True)
    z = logits - m
    lse = jnp.log(jnp.sum(jnp.exp(z), axis=-1, keepdims=True))
    logp_ref[...] = z - lse


@functools.partial(jax.jit, static_argnames=("hidden_size",))
def lstm_forward(x, params, h0, c0, *, hidden_size):
    """x: (seq_len, input_size); h0/c0: (num_layers=1, 1, hidden_size)."""
    seq_len, input_size = x.shape
    w_ih_t, w_hh_t, b, w_lin_t, b_lin = params
    output_size = w_lin_t.shape[1]

    vmem = pl.BlockSpec(memory_space=pltpu.MemorySpace.VMEM)

    # Advisory cost estimate so XLA can schedule around this tiny custom call.
    flops = (2 * seq_len * input_size * 4 * hidden_size        # x @ W_ih
             + 2 * seq_len * hidden_size * 4 * hidden_size     # h @ W_hh (per step)
             + 10 * seq_len * hidden_size                      # cell update VPU work
             + 2 * hidden_size * output_size                   # final linear
             + 4 * output_size)                                # log-softmax
    transcendentals = (seq_len * (2 * 4 * hidden_size + hidden_size)
                       + output_size)                          # sigmoid/tanh/exp
    bytes_accessed = 4 * (x.size + w_ih_t.size + w_hh_t.size + b.size
                          + 2 * hidden_size                    # h0, c0
                          + w_lin_t.size + b_lin.size
                          + output_size + 2 * hidden_size)     # outputs

    logp, hn, cn = pl.pallas_call(
        _lstm_kernel,
        out_shape=(
            jax.ShapeDtypeStruct((1, output_size), jnp.float32),
            jax.ShapeDtypeStruct((1, hidden_size), jnp.float32),
            jax.ShapeDtypeStruct((1, hidden_size), jnp.float32),
        ),
        in_specs=[vmem] * 8,
        out_specs=(vmem, vmem, vmem),
        cost_estimate=pl.CostEstimate(
            flops=flops,
            transcendentals=transcendentals,
            bytes_accessed=bytes_accessed,
        ),
    )(
        x,
        w_ih_t,
        w_hh_t,
        b,
        h0.reshape(1, hidden_size),
        c0.reshape(1, hidden_size),
        w_lin_t,
        b_lin,
    )
    # Match PyTorch's (num_layers, batch, hidden) convention for hn / cn.
    return logp, hn.reshape(1, 1, hidden_size), cn.reshape(1, 1, hidden_size)


def init_params(key, input_size, hidden_size, output_size):
    """Deterministic synthetic parameters (same shapes as nn.LSTM + nn.Linear)."""
    k1, k2, k3, k4, k5, k6 = jax.random.split(key, 6)
    bound = 1.0 / jnp.sqrt(hidden_size)
    # PyTorch stores weight_ih_l0 as (4H, I); we keep the transposed layout.
    w_ih_t = jax.random.uniform(k1, (input_size, 4 * hidden_size),
                                minval=-bound, maxval=bound, dtype=jnp.float32)
    w_hh_t = jax.random.uniform(k2, (hidden_size, 4 * hidden_size),
                                minval=-bound, maxval=bound, dtype=jnp.float32)
    b_ih = jax.random.uniform(k3, (4 * hidden_size,),
                              minval=-bound, maxval=bound, dtype=jnp.float32)
    b_hh = jax.random.uniform(k4, (4 * hidden_size,),
                              minval=-bound, maxval=bound, dtype=jnp.float32)
    b = (b_ih + b_hh).reshape(1, 4 * hidden_size)
    lin_bound = 1.0 / jnp.sqrt(hidden_size)
    w_lin_t = jax.random.uniform(k5, (hidden_size, output_size),
                                 minval=-lin_bound, maxval=lin_bound,
                                 dtype=jnp.float32)
    b_lin = jax.random.uniform(k6, (1, output_size),
                               minval=-lin_bound, maxval=lin_bound,
                               dtype=jnp.float32)
    return (w_ih_t, w_hh_t, b, w_lin_t, b_lin)


def _lstm_reference(x, params, h0, c0, hidden_size):
    """Pure-JAX reference for correctness checking."""
    w_ih_t, w_hh_t, b, w_lin_t, b_lin = params
    h = h0.reshape(1, hidden_size)
    c = c0.reshape(1, hidden_size)
    H = hidden_size
    for t in range(x.shape[0]):
        gates = x[t:t + 1] @ w_ih_t + h @ w_hh_t + b
        i_g = jax.nn.sigmoid(gates[:, 0 * H:1 * H])
        f_g = jax.nn.sigmoid(gates[:, 1 * H:2 * H])
        g_g = jnp.tanh(gates[:, 2 * H:3 * H])
        o_g = jax.nn.sigmoid(gates[:, 3 * H:4 * H])
        c = f_g * c + i_g * g_g
        h = o_g * jnp.tanh(c)
    logits = h @ w_lin_t + b_lin
    logp = jax.nn.log_softmax(logits, axis=-1)
    return logp, h, c


if __name__ == "__main__":
    input_size = 16     # e.g. n_letters
    hidden_size = 32
    output_size = 10    # e.g. n_categories
    num_layers = 1
    seq_len = 8

    key = jax.random.PRNGKey(0)
    k_x, k_p = jax.random.split(key)

    # Forward input: (seq_len, input_size), unsqueezed to batch=1 inside.
    x = jax.random.normal(k_x, (seq_len, input_size), dtype=jnp.float32)
    params = init_params(k_p, input_size, hidden_size, output_size)

    # inithidden(): zeros of shape (num_layers, 1, hidden_size)
    h0 = jnp.zeros((num_layers, 1, hidden_size), dtype=jnp.float32)
    c0 = jnp.zeros((num_layers, 1, hidden_size), dtype=jnp.float32)

    logp, hn, cn = lstm_forward(x, params, h0, c0, hidden_size=hidden_size)
    jax.block_until_ready((logp, hn, cn))

    assert logp.shape == (1, output_size)
    assert hn.shape == (num_layers, 1, hidden_size)
    assert cn.shape == (num_layers, 1, hidden_size)
    # log-softmax sanity: probabilities sum to 1
    assert abs(float(jnp.sum(jnp.exp(logp))) - 1.0) < 1e-4

    # Numerical check against a pure-JAX reference.
    logp_ref, hn_ref, cn_ref = _lstm_reference(x, params, h0, c0, hidden_size)
    assert jnp.allclose(logp, logp_ref, atol=1e-5, rtol=1e-5)
    assert jnp.allclose(hn.reshape(1, hidden_size), hn_ref, atol=1e-5, rtol=1e-5)
    assert jnp.allclose(cn.reshape(1, hidden_size), cn_ref, atol=1e-5, rtol=1e-5)

    print("KERNEL_OK")
</pallas_src>

<mosaic_0001>
module attributes {stable_mosaic.version = 11 : i64} {
  func.func @_lstm_kernel(%arg0: memref<8x16xf32, #tpu.memory_space<vmem>>, %arg1: memref<16x128xf32, #tpu.memory_space<vmem>>, %arg2: memref<32x128xf32, #tpu.memory_space<vmem>>, %arg3: memref<1x128xf32, #tpu.memory_space<vmem>>, %arg4: memref<1x32xf32, #tpu.memory_space<vmem>>, %arg5: memref<1x32xf32, #tpu.memory_space<vmem>>, %arg6: memref<32x10xf32, #tpu.memory_space<vmem>>, %arg7: memref<1x10xf32, #tpu.memory_space<vmem>>, %arg8: memref<1x10xf32, #tpu.memory_space<vmem>>, %arg9: memref<1x32xf32, #tpu.memory_space<vmem>>, %arg10: memref<1x32xf32, #tpu.memory_space<vmem>>) attributes {dimension_semantics = [], scalar_prefetch = 0 : i64, scratch_operands = 0 : i64, tpu.core_type = #tpu.core_type<tc>} {
    %c0 = arith.constant 0 : index
    %c0_0 = arith.constant 0 : index
    %0 = vector.load %arg2[%c0, %c0_0] : memref<32x128xf32, #tpu.memory_space<vmem>>, vector<32x128xf32>
    %c0_1 = arith.constant 0 : index
    %c0_2 = arith.constant 0 : index
    %1 = vector.load %arg0[%c0_1, %c0_2] : memref<8x16xf32, #tpu.memory_space<vmem>>, vector<8x16xf32>
    %c0_3 = arith.constant 0 : index
    %c0_4 = arith.constant 0 : index
    %2 = vector.load %arg1[%c0_3, %c0_4] : memref<16x128xf32, #tpu.memory_space<vmem>>, vector<16x128xf32>
    %cst = arith.constant dense<0.000000e+00> : vector<8x128xf32>
    %3 = tpu.matmul %1, %2, %cst {dimension_numbers = #tpu.dot_dimension_numbers<[1], [0], [0], [1], [0, 0, 1, 1], [], []>} : vector<8x16xf32>, vector<16x128xf32>, vector<8x128xf32> -> vector<8x128xf32>
    %c0_5 = arith.constant 0 : index
    %c0_6 = arith.constant 0 : index
    %4 = vector.load %arg3[%c0_5, %c0_6] : memref<1x128xf32, #tpu.memory_space<vmem>>, vector<1x128xf32>
    %5 = vector.broadcast %4 : vector<1x128xf32> to vector<8x128xf32>
    %6 = arith.addf %3, %5 : vector<8x128xf32>
    %c0_7 = arith.constant 0 : index
    %c0_8 = arith.constant 0 : index
    %7 = vector.load %arg4[%c0_7, %c0_8] : memref<1x32xf32, #tpu.memory_space<vmem>>, vector<1x32xf32>
    %c0_9 = arith.constant 0 : index
    %c0_10 = arith.constant 0 : index
    %8 = vector.load %arg5[%c0_9, %c0_10] : memref<1x32xf32, #tpu.memory_space<vmem>>, vector<1x32xf32>
    %9 = vector.extract_strided_slice %6 {offsets = [0, 0], sizes = [1, 128], strides = [1, 1]} : vector<8x128xf32> to vector<1x128xf32>
    %cst_11 = arith.constant dense<0.000000e+00> : vector<1x128xf32>
    %10 = tpu.matmul %7, %0, %cst_11 {dimension_numbers = #tpu.dot_dimension_numbers<[1], [0], [0], [1], [0, 0, 1, 1], [], []>} : vector<1x32xf32>, vector<32x128xf32>, vector<1x128xf32> -> vector<1x128xf32>
    %11 = arith.addf %9, %10 : vector<1x128xf32>
    %12 = arith.negf %11 : vector<1x128xf32>
    %13 = math.exp %12 : vector<1x128xf32>
    %cst_12 = arith.constant 1.000000e+00 : f32
    %14 = vector.broadcast %cst_12 : f32 to vector<1x128xf32>
    %15 = arith.addf %14, %13 : vector<1x128xf32>
    %16 = arith.divf %14, %15 : vector<1x128xf32>
    %17 = math.tanh %11 : vector<1x128xf32>
    %18 = vector.extract_strided_slice %16 {offsets = [0, 0], sizes = [1, 32], strides = [1, 1]} : vector<1x128xf32> to vector<1x32xf32>
    %19 = vector.extract_strided_slice %16 {offsets = [0, 32], sizes = [1, 32], strides = [1, 1]} : vector<1x128xf32> to vector<1x32xf32>
    %20 = vector.extract_strided_slice %17 {offsets = [0, 64], sizes = [1, 32], strides = [1, 1]} : vector<1x128xf32> to vector<1x32xf32>
    %21 = vector.extract_strided_slice %16 {offsets = [0, 96], sizes = [1, 32], strides = [1, 1]} : vector<1x128xf32> to vector<1x32xf32>
    %22 = arith.mulf %19, %8 : vector<1x32xf32>
    %23 = arith.mulf %18, %20 : vector<1x32xf32>
    %24 = arith.addf %22, %23 : vector<1x32xf32>
    %25 = math.tanh %24 : vector<1x32xf32>
    %26 = arith.mulf %21, %25 : vector<1x32xf32>
    %27 = vector.extract_strided_slice %6 {offsets = [1, 0], sizes = [1, 128], strides = [1, 1]} : vector<8x128xf32> to vector<1x128xf32>
    %cst_13 = arith.constant dense<0.000000e+00> : vector<1x128xf32>
    %28 = tpu.matmul %26, %0, %cst_13 {dimension_numbers = #tpu.dot_dimension_numbers<[1], [0], [0], [1], [0, 0, 1, 1], [], []>} : vector<1x32xf32>, vector<32x128xf32>, vector<1x128xf32> -> vector<1x128xf32>
    %29 = arith.addf %27, %28 : vector<1x128xf32>
    %30 = arith.negf %29 : vector<1x128xf32>
    %31 = math.exp %30 : vector<1x128xf32>
    %cst_14 = arith.constant 1.000000e+00 : f32
    %32 = vector.broadcast %cst_14 : f32 to vector<1x128xf32>
    %33 = arith.addf %32, %31 : vector<1x128xf32>
    %34 = arith.divf %32, %33 : vector<1x128xf32>
    %35 = math.tanh %29 : vector<1x128xf32>
    %36 = vector.extract_strided_slice %34 {offsets = [0, 0], sizes = [1, 32], strides = [1, 1]} : vector<1x128xf32> to vector<1x32xf32>
    %37 = vector.extract_strided_slice %34 {offsets = [0, 32], sizes = [1, 32], strides = [1, 1]} : vector<1x128xf32> to vector<1x32xf32>
    %38 = vector.extract_strided_slice %35 {offsets = [0, 64], sizes = [1, 32], strides = [1, 1]} : vector<1x128xf32> to vector<1x32xf32>
    %39 = vector.extract_strided_slice %34 {offsets = [0, 96], sizes = [1, 32], strides = [1, 1]} : vector<1x128xf32> to vector<1x32xf32>
    %40 = arith.mulf %37, %24 : vector<1x32xf32>
    %41 = arith.mulf %36, %38 : vector<1x32xf32>
    %42 = arith.addf %40, %41 : vector<1x32xf32>
    %43 = math.tanh %42 : vector<1x32xf32>
    %44 = arith.mulf %39, %43 : vector<1x32xf32>
    %45 = vector.extract_strided_slice %6 {offsets = [2, 0], sizes = [1, 128], strides = [1, 1]} : vector<8x128xf32> to vector<1x128xf32>
    %cst_15 = arith.constant dense<0.000000e+00> : vector<1x128xf32>
    %46 = tpu.matmul %44, %0, %cst_15 {dimension_numbers = #tpu.dot_dimension_numbers<[1], [0], [0], [1], [0, 0, 1, 1], [], []>} : vector<1x32xf32>, vector<32x128xf32>, vector<1x128xf32> -> vector<1x128xf32>
    %47 = arith.addf %45, %46 : vector<1x128xf32>
    %48 = arith.negf %47 : vector<1x128xf32>
    %49 = math.exp %48 : vector<1x128xf32>
    %cst_16 = arith.constant 1.000000e+00 : f32
    %50 = vector.broadcast %cst_16 : f32 to vector<1x128xf32>
    %51 = arith.addf %50, %49 : vector<1x128xf32>
    %52 = arith.divf %50, %51 : vector<1x128xf32>
    %53 = math.tanh %47 : vector<1x128xf32>
    %54 = vector.extract_strided_slice %52 {offsets = [0, 0], sizes = [1, 32], strides = [1, 1]} : vector<1x128xf32> to vector<1x32xf32>
    %55 = vector.extract_strided_slice %52 {offsets = [0, 32], sizes = [1, 32], strides = [1, 1]} : vector<1x128xf32> to vector<1x32xf32>
    %56 = vector.extract_strided_slice %53 {offsets = [0, 64], sizes = [1, 32], strides = [1, 1]} : vector<1x128xf32> to vector<1x32xf32>
    %57 = vector.extract_strided_slice %52 {offsets = [0, 96], sizes = [1, 32], strides = [1, 1]} : vector<1x128xf32> to vector<1x32xf32>
    %58 = arith.mulf %55, %42 : vector<1x32xf32>
    %59 = arith.mulf %54, %56 : vector<1x32xf32>
    %60 = arith.addf %58, %59 : vector<1x32xf32>
    %61 = math.tanh %60 : vector<1x32xf32>
    %62 = arith.mulf %57, %61 : vector<1x32xf32>
    %63 = vector.extract_strided_slice %6 {offsets = [3, 0], sizes = [1, 128], strides = [1, 1]} : vector<8x128xf32> to vector<1x128xf32>
    %cst_17 = arith.constant dense<0.000000e+00> : vector<1x128xf32>
    %64 = tpu.matmul %62, %0, %cst_17 {dimension_numbers = #tpu.dot_dimension_numbers<[1], [0], [0], [1], [0, 0, 1, 1], [], []>} : vector<1x32xf32>, vector<32x128xf32>, vector<1x128xf32> -> vector<1x128xf32>
    %65 = arith.addf %63, %64 : vector<1x128xf32>
    %66 = arith.negf %65 : vector<1x128xf32>
    %67 = math.exp %66 : vector<1x128xf32>
    %cst_18 = arith.constant 1.000000e+00 : f32
    %68 = vector.broadcast %cst_18 : f32 to vector<1x128xf32>
    %69 = arith.addf %68, %67 : vector<1x128xf32>
    %70 = arith.divf %68, %69 : vector<1x128xf32>
    %71 = math.tanh %65 : vector<1x128xf32>
    %72 = vector.extract_strided_slice %70 {offsets = [0, 0], sizes = [1, 32], strides = [1, 1]} : vector<1x128xf32> to vector<1x32xf32>
    %73 = vector.extract_strided_slice %70 {offsets = [0, 32], sizes = [1, 32], strides = [1, 1]} : vector<1x128xf32> to vector<1x32xf32>
    %74 = vector.extract_strided_slice %71 {offsets = [0, 64], sizes = [1, 32], strides = [1, 1]} : vector<1x128xf32> to vector<1x32xf32>
    %75 = vector.extract_strided_slice %70 {offsets = [0, 96], sizes = [1, 32], strides = [1, 1]} : vector<1x128xf32> to vector<1x32xf32>
    %76 = arith.mulf %73, %60 : vector<1x32xf32>
    %77 = arith.mulf %72, %74 : vector<1x32xf32>
    %78 = arith.addf %76, %77 : vector<1x32xf32>
    %79 = math.tanh %78 : vector<1x32xf32>
    %80 = arith.mulf %75, %79 : vector<1x32xf32>
    %81 = vector.extract_strided_slice %6 {offsets = [4, 0], sizes = [1, 128], strides = [1, 1]} : vector<8x128xf32> to vector<1x128xf32>
    %cst_19 = arith.constant dense<0.000000e+00> : vector<1x128xf32>
    %82 = tpu.matmul %80, %0, %cst_19 {dimension_numbers = #tpu.dot_dimension_numbers<[1], [0], [0], [1], [0, 0, 1, 1], [], []>} : vector<1x32xf32>, vector<32x128xf32>, vector<1x128xf32> -> vector<1x128xf32>
    %83 = arith.addf %81, %82 : vector<1x128xf32>
    %84 = arith.negf %83 : vector<1x128xf32>
    %85 = math.exp %84 : vector<1x128xf32>
    %cst_20 = arith.constant 1.000000e+00 : f32
    %86 = vector.broadcast %cst_20 : f32 to vector<1x128xf32>
    %87 = arith.addf %86, %85 : vector<1x128xf32>
    %88 = arith.divf %86, %87 : vector<1x128xf32>
    %89 = math.tanh %83 : vector<1x128xf32>
    %90 = vector.extract_strided_slice %88 {offsets = [0, 0], sizes = [1, 32], strides = [1, 1]} : vector<1x128xf32> to vector<1x32xf32>
    %91 = vector.extract_strided_slice %88 {offsets = [0, 32], sizes = [1, 32], strides = [1, 1]} : vector<1x128xf32> to vector<1x32xf32>
    %92 = vector.extract_strided_slice %89 {offsets = [0, 64], sizes = [1, 32], strides = [1, 1]} : vector<1x128xf32> to vector<1x32xf32>
    %93 = vector.extract_strided_slice %88 {offsets = [0, 96], sizes = [1, 32], strides = [1, 1]} : vector<1x128xf32> to vector<1x32xf32>
    %94 = arith.mulf %91, %78 : vector<1x32xf32>
    %95 = arith.mulf %90, %92 : vector<1x32xf32>
    %96 = arith.addf %94, %95 : vector<1x32xf32>
    %97 = math.tanh %96 : vector<1x32xf32>
    %98 = arith.mulf %93, %97 : vector<1x32xf32>
    %99 = vector.extract_strided_slice %6 {offsets = [5, 0], sizes = [1, 128], strides = [1, 1]} : vector<8x128xf32> to vector<1x128xf32>
    %cst_21 = arith.constant dense<0.000000e+00> : vector<1x128xf32>
    %100 = tpu.matmul %98, %0, %cst_21 {dimension_numbers = #tpu.dot_dimension_numbers<[1], [0], [0], [1], [0, 0, 1, 1], [], []>} : vector<1x32xf32>, vector<32x128xf32>, vector<1x128xf32> -> vector<1x128xf32>
    %101 = arith.addf %99, %100 : vector<1x128xf32>
    %102 = arith.negf %101 : vector<1x128xf32>
    %103 = math.exp %102 : vector<1x128xf32>
    %cst_22 = arith.constant 1.000000e+00 : f32
    %104 = vector.broadcast %cst_22 : f32 to vector<1x128xf32>
    %105 = arith.addf %104, %103 : vector<1x128xf32>
    %106 = arith.divf %104, %105 : vector<1x128xf32>
    %107 = math.tanh %101 : vector<1x128xf32>
    %108 = vector.extract_strided_slice %106 {offsets = [0, 0], sizes = [1, 32], strides = [1, 1]} : vector<1x128xf32> to vector<1x32xf32>
    %109 = vector.extract_strided_slice %106 {offsets = [0, 32], sizes = [1, 32], strides = [1, 1]} : vector<1x128xf32> to vector<1x32xf32>
    %110 = vector.extract_strided_slice %107 {offsets = [0, 64], sizes = [1, 32], strides = [1, 1]} : vector<1x128xf32> to vector<1x32xf32>
    %111 = vector.extract_strided_slice %106 {offsets = [0, 96], sizes = [1, 32], strides = [1, 1]} : vector<1x128xf32> to vector<1x32xf32>
    %112 = arith.mulf %109, %96 : vector<1x32xf32>
    %113 = arith.mulf %108, %110 : vector<1x32xf32>
    %114 = arith.addf %112, %113 : vector<1x32xf32>
    %115 = math.tanh %114 : vector<1x32xf32>
    %116 = arith.mulf %111, %115 : vector<1x32xf32>
    %117 = vector.extract_strided_slice %6 {offsets = [6, 0], sizes = [1, 128], strides = [1, 1]} : vector<8x128xf32> to vector<1x128xf32>
    %cst_23 = arith.constant dense<0.000000e+00> : vector<1x128xf32>
    %118 = tpu.matmul %116, %0, %cst_23 {dimension_numbers = #tpu.dot_dimension_numbers<[1], [0], [0], [1], [0, 0, 1, 1], [], []>} : vector<1x32xf32>, vector<32x128xf32>, vector<1x128xf32> -> vector<1x128xf32>
    %119 = arith.addf %117, %118 : vector<1x128xf32>
    %120 = arith.negf %119 : vector<1x128xf32>
    %121 = math.exp %120 : vector<1x128xf32>
    %cst_24 = arith.constant 1.000000e+00 : f32
    %122 = vector.broadcast %cst_24 : f32 to vector<1x128xf32>
    %123 = arith.addf %122, %121 : vector<1x128xf32>
    %124 = arith.divf %122, %123 : vector<1x128xf32>
    %125 = math.tanh %119 : vector<1x128xf32>
    %126 = vector.extract_strided_slice %124 {offsets = [0, 0], sizes = [1, 32], strides = [1, 1]} : vector<1x128xf32> to vector<1x32xf32>
    %127 = vector.extract_strided_slice %124 {offsets = [0, 32], sizes = [1, 32], strides = [1, 1]} : vector<1x128xf32> to vector<1x32xf32>
    %128 = vector.extract_strided_slice %125 {offsets = [0, 64], sizes = [1, 32], strides = [1, 1]} : vector<1x128xf32> to vector<1x32xf32>
    %129 = vector.extract_strided_slice %124 {offsets = [0, 96], sizes = [1, 32], strides = [1, 1]} : vector<1x128xf32> to vector<1x32xf32>
    %130 = arith.mulf %127, %114 : vector<1x32xf32>
    %131 = arith.mulf %126, %128 : vector<1x32xf32>
    %132 = arith.addf %130, %131 : vector<1x32xf32>
    %133 = math.tanh %132 : vector<1x32xf32>
    %134 = arith.mulf %129, %133 : vector<1x32xf32>
    %135 = vector.extract_strided_slice %6 {offsets = [7, 0], sizes = [1, 128], strides = [1, 1]} : vector<8x128xf32> to vector<1x128xf32>
    %cst_25 = arith.constant dense<0.000000e+00> : vector<1x128xf32>
    %136 = tpu.matmul %134, %0, %cst_25 {dimension_numbers = #tpu.dot_dimension_numbers<[1], [0], [0], [1], [0, 0, 1, 1], [], []>} : vector<1x32xf32>, vector<32x128xf32>, vector<1x128xf32> -> vector<1x128xf32>
    %137 = arith.addf %135, %136 : vector<1x128xf32>
    %138 = arith.negf %137 : vector<1x128xf32>
    %139 = math.exp %138 : vector<1x128xf32>
    %cst_26 = arith.constant 1.000000e+00 : f32
    %140 = vector.broadcast %cst_26 : f32 to vector<1x128xf32>
    %141 = arith.addf %140, %139 : vector<1x128xf32>
    %142 = arith.divf %140, %141 : vector<1x128xf32>
    %143 = math.tanh %137 : vector<1x128xf32>
    %144 = vector.extract_strided_slice %142 {offsets = [0, 0], sizes = [1, 32], strides = [1, 1]} : vector<1x128xf32> to vector<1x32xf32>
    %145 = vector.extract_strided_slice %142 {offsets = [0, 32], sizes = [1, 32], strides = [1, 1]} : vector<1x128xf32> to vector<1x32xf32>
    %146 = vector.extract_strided_slice %143 {offsets = [0, 64], sizes = [1, 32], strides = [1, 1]} : vector<1x128xf32> to vector<1x32xf32>
    %147 = vector.extract_strided_slice %142 {offsets = [0, 96], sizes = [1, 32], strides = [1, 1]} : vector<1x128xf32> to vector<1x32xf32>
    %148 = arith.mulf %145, %132 : vector<1x32xf32>
    %149 = arith.mulf %144, %146 : vector<1x32xf32>
    %150 = arith.addf %148, %149 : vector<1x32xf32>
    %151 = math.tanh %150 : vector<1x32xf32>
    %152 = arith.mulf %147, %151 : vector<1x32xf32>
    %c0_27 = arith.constant 0 : index
    %c0_28 = arith.constant 0 : index
    %153 = vector.load %arg9[%c0_27, %c0_28] : memref<1x32xf32, #tpu.memory_space<vmem>>, vector<1x32xf32>
    tpu.vector_store %arg9[%c0_27, %c0_28], %152 {strides = array<i32>} : memref<1x32xf32, #tpu.memory_space<vmem>>, vector<1x32xf32>,
    %c0_29 = arith.constant 0 : index
    %c0_30 = arith.constant 0 : index
    %154 = vector.load %arg10[%c0_29, %c0_30] : memref<1x32xf32, #tpu.memory_space<vmem>>, vector<1x32xf32>
    tpu.vector_store %arg10[%c0_29, %c0_30], %150 {strides = array<i32>} : memref<1x32xf32, #tpu.memory_space<vmem>>, vector<1x32xf32>,
    %c0_31 = arith.constant 0 : index
    %c0_32 = arith.constant 0 : index
    %155 = vector.load %arg6[%c0_31, %c0_32] : memref<32x10xf32, #tpu.memory_space<vmem>>, vector<32x10xf32>
    %cst_33 = arith.constant dense<0.000000e+00> : vector<1x10xf32>
    %156 = tpu.matmul %152, %155, %cst_33 {dimension_numbers = #tpu.dot_dimension_numbers<[1], [0], [0], [1], [0, 0, 1, 1], [], []>} : vector<1x32xf32>, vector<32x10xf32>, vector<1x10xf32> -> vector<1x10xf32>
    %c0_34 = arith.constant 0 : index
    %c0_35 = arith.constant 0 : index
    %157 = vector.load %arg7[%c0_34, %c0_35] : memref<1x10xf32, #tpu.memory_space<vmem>>, vector<1x10xf32>
    %158 = arith.addf %156, %157 : vector<1x10xf32>
    %cst_36 = arith.constant dense<0xFF800000> : vector<1xf32>
    %159 = vector.multi_reduction <maximumf>, %158, %cst_36 [1] : vector<1x10xf32> to vector<1xf32>
    %160 = vector.shape_cast %159 : vector<1xf32> to vector<1x1xf32>
    %161 = vector.broadcast %160 : vector<1x1xf32> to vector<1x10xf32>
    %162 = arith.subf %158, %161 : vector<1x10xf32>
    %163 = math.exp %162 : vector<1x10xf32>
    %cst_37 = arith.constant dense<0.000000e+00> : vector<1xf32>
    %164 = vector.multi_reduction <add>, %163, %cst_37 [1] : vector<1x10xf32> to vector<1xf32>
    %165 = vector.shape_cast %164 : vector<1xf32> to vector<1x1xf32>
    %166 = math.log %165 : vector<1x1xf32>
    %167 = vector.broadcast %166 : vector<1x1xf32> to vector<1x10xf32>
    %168 = arith.subf %162, %167 : vector<1x10xf32>
    %c0_38 = arith.constant 0 : index
    %c0_39 = arith.constant 0 : index
    %169 = vector.load %arg8[%c0_38, %c0_39] : memref<1x10xf32, #tpu.memory_space<vmem>>, vector<1x10xf32>
    tpu.vector_store %arg8[%c0_38, %c0_39], %168 {strides = array<i32>} : memref<1x10xf32, #tpu.memory_space<vmem>>, vector<1x10xf32>,
    return
  }
}

</mosaic_0001>

<llo_original>
// kernel: lstm_forward.1
$region0: #{lstm_forward.1}
  #allocation0 [shape = 'u32[]', space=smem, size = 0x4, offset = 0x4, fixed_abs, tag = 'smem constant byte address 0x4 - core index']
  #allocation1 [shape = 'u32[144,128]{1,0:T(1,128)}', space=vmem, size = 0x12000, scoped, tag = 'internal scratch']
  %s0 = inlined_call_operand.hbm [shape: f32[8,16], index: 0, kind: input, shape index: {}]
  %s1 = inlined_call_operand.vmem [shape: f32[16,128], index: 1, kind: input, shape index: {}]
  %s2 = inlined_call_operand.vmem [shape: f32[32,128], index: 2, kind: input, shape index: {}]
  %s3 = inlined_call_operand.vmem [shape: f32[1,128], index: 3, kind: input, shape index: {}]
  %s4 = inlined_call_operand.vmem [shape: f32[1,32], index: 4, kind: input, shape index: {}]
  %s5 = inlined_call_operand.vmem [shape: f32[1,32], index: 5, kind: input, shape index: {}]
  %s6 = inlined_call_operand.vmem [shape: f32[32,10], index: 6, kind: input, shape index: {}]
  %s7 = inlined_call_operand.vmem [shape: f32[1,10], index: 7, kind: input, shape index: {}]
  %s8 = inlined_call_operand.hbm [shape: f32[1,10], index: 8, kind: output, shape index: {0}]
  %s9 = inlined_call_operand.hbm [shape: f32[1,32], index: 9, kind: output, shape index: {1}]
  %s10 = inlined_call_operand.hbm [shape: f32[1,32], index: 10, kind: output, shape index: {2}]
  %11 = xla_tuple %s8, %s9, %s10
  %s12 = sld [smem:[#allocation0]]
  $region62: #{lstm_forward.1} parent=0
    _
  %s14 = ssub.s32 1, %s12
  %s15 = scalar_select 0, %s14, %s12
  $region1: #{lstm_forward.1} parent=0
    #allocation2 [shape = 'u8[4096]{0}', space=vmem, size = 0x1000, scoped, tag = 'input window, operand 0, single buffered']
    #allocation3 [shape = 's32[1]{0}', space=sflag, size = 0x4, scoped, tag = 'scoped memory for lstm_forward.1']
    #allocation4 [shape = 's32[1]{0}', space=sflag, size = 0x4, scoped, tag = 'scoped memory for lstm_forward.1']
    #allocation5 [shape = 'u8[512]{0}', space=vmem, size = 0x400, scoped, tag = 'output window, operand 0, single buffered']
    #allocation6 [shape = 'u8[512]{0}', space=vmem, size = 0x400, scoped, tag = 'output window, operand 1, single buffered']
    #allocation7 [shape = 's32[1]{0}', space=sflag, size = 0x4, scoped, tag = 'scoped memory for lstm_forward.1']
    #allocation8 [shape = 'u8[512]{0}', space=vmem, size = 0x400, scoped, tag = 'output window, operand 2, single buffered']
    %16 = vsyncpa [#allocation3], 0
    %17 = vsyncpa [#allocation4], 0
    %18 = vsyncpa [#allocation7], 0
    // Predicated region
    $region2: #{lstm_forward.1} parent=1 // pred_check
      _
    $region3: #{lstm_forward.1} parent=1 // pred_check_branch
      %20 = sbr.rel (0) target = $region5
    $region4: #{lstm_forward.1} parent=1 // pred_region
      %s22 = ssub.s32 128, 128
      %23 = vsyncadd [#allocation3], %s22
      %s25 = sshll.u32 [#allocation2], 4
      %s26 = int_to_ptr.vmem [resolvable:$true] %s25
      %28 = dma.hbm_to_vmem [thread:$0]  %s0, 128, %s26, [#allocation3]
    $region5: #{lstm_forward.1} parent=1 // pred_fallthru
      _
    // Predicated region
    $region6: #{lstm_forward.1} parent=1 // pred_check
      _
    $region7: #{lstm_forward.1} parent=1 // pred_check_branch
      %30 = sbr.rel (0) target = $region9
    $region8: #{lstm_forward.1} parent=1 // pred_region
      _
    $region9: #{lstm_forward.1} parent=1 // pred_fallthru
      _
    // Predicated region
    $region10: #{lstm_forward.1} parent=1 // pred_check
      _
    $region11: #{lstm_forward.1} parent=1 // pred_check_branch
      %32 = sbr.rel (0) target = $region13
    $region12: #{lstm_forward.1} parent=1 // pred_region
      _
    $region13: #{lstm_forward.1} parent=1 // pred_fallthru
      _
    // Predicated region
    $region14: #{lstm_forward.1} parent=1 // pred_check
      _
    $region15: #{lstm_forward.1} parent=1 // pred_check_branch
      %34 = sbr.rel (0) target = $region17
    $region16: #{lstm_forward.1} parent=1 // pred_region
      _
    $region17: #{lstm_forward.1} parent=1 // pred_fallthru
      _
    // Predicated region
    $region18: #{lstm_forward.1} parent=1 // pred_check
      _
    $region19: #{lstm_forward.1} parent=1 // pred_check_branch
      %36 = sbr.rel (0) target = $region21
    $region20: #{lstm_forward.1} parent=1 // pred_region
      _
    $region21: #{lstm_forward.1} parent=1 // pred_fallthru
      _
    // Predicated region
    $region22: #{lstm_forward.1} parent=1 // pred_check
      _
    $region23: #{lstm_forward.1} parent=1 // pred_check_branch
      %38 = sbr.rel (0) target = $region25
    $region24: #{lstm_forward.1} parent=1 // pred_region
      _
    $region25: #{lstm_forward.1} parent=1 // pred_fallthru
      _
    // Predicated region
    $region26: #{lstm_forward.1} parent=1 // pred_check
      _
    $region27: #{lstm_forward.1} parent=1 // pred_check_branch
      %40 = sbr.rel (0) target = $region29
    $region28: #{lstm_forward.1} parent=1 // pred_region
      _
    $region29: #{lstm_forward.1} parent=1 // pred_fallthru
      _
    // Predicated region
    $region30: #{lstm_forward.1} parent=1 // pred_check
      _
    $region31: #{lstm_forward.1} parent=1 // pred_check_branch
      %42 = sbr.rel (0) target = $region33
    $region32: #{lstm_forward.1} parent=1 // pred_region
      _
    $region33: #{lstm_forward.1} parent=1 // pred_fallthru
      _
    // Predicated region
    $region34: #{lstm_forward.1} parent=1 // pred_check
      _
    $region35: #{lstm_forward.1} parent=1 // pred_check_branch
      %44 = sbr.rel (0) target = $region37
    $region36: #{lstm_forward.1} parent=1 // pred_region
      %45 = dma.done [#allocation3], 128
    $region37: #{lstm_forward.1} parent=1 // pred_fallthru
      _
    %v46 = vld [vmem:[%s2] sm:$0xff]
    %v47 = vld [vmem:[%s2 + $0x8] sm:$0xff]
    %v48 = vld [vmem:[%s2 + $0x10] sm:$0xff]
    %v49 = vld [vmem:[%s2 + $0x18] sm:$0xff]
    %v50 = vld [vmem:[#allocation2] sm:$0xff]
    %v51 = vld [vmem:[%s1] sm:$0xff]
    %v52 = vld [vmem:[%s1 + $0x8] sm:$0xff]
    %v53 = vld [vmem:[%s3] sm:$0x1]
    %v55 = vlaneseq
    %v56 = vshrl.u32 %v55, 7
    %v57 = vsub.s32 0, %v56
    %v58 = vrot.slane %v53, %v57
    %vm60 = vcmask 130048
    %v62 = vsel %vm60, %v50, 0
    %64 = vmatprep.subr.mxu0 0.0
    %65 = vmatpush1.msra.mxu0 %v51
    %66 = vmatprep.subr.mxu0 0.0
    %67 = vmatpush1.msra.mxu0 %v52
    %68 = vmatprep.subr.mxu0 0.0
    %69 = vmatpush1.msra.mxu0 0.0
    %70 = vmatprep.subr.mxu0 0.0
    %71 = vmatpush1.msra.mxu0 0.0
    %72 = vmatprep.subr.mxu0 0.0
    %73 = vmatpush1.msra.mxu0 0.0
    %74 = vmatprep.subr.mxu0 0.0
    %75 = vmatpush1.msra.mxu0 0.0
    %76 = vmatprep.subr.mxu0 0.0
    %77 = vmatpush1.msra.mxu0 0.0
    %78 = vmatprep.subr.mxu0 0.0
    %79 = vmatpush1.msra.mxu0 0.0
    %80 = vmatprep.subr.mxu0 0.0
    %81 = vmatpush1.msra.mxu0 0.0
    %82 = vmatprep.subr.mxu0 0.0
    %83 = vmatpush1.msra.mxu0 0.0
    %84 = vmatprep.subr.mxu0 0.0
    %85 = vmatpush1.msra.mxu0 0.0
    %86 = vmatprep.subr.mxu0 0.0
    %87 = vmatpush1.msra.mxu0 0.0
    %88 = vmatprep.subr.mxu0 0.0
    %89 = vmatpush1.msra.mxu0 0.0
    %90 = vmatprep.subr.mxu0 0.0
    %91 = vmatpush1.msra.mxu0 0.0
    %92 = vmatprep.subr.mxu0 0.0
    %93 = vmatpush1.msra.mxu0 0.0
    %94 = vmatprep.subr.mxu0 0.0
    %95 = vmatpush1.msra.mxu0 0.0
    %96 = vmatprep.subr.mxu0 0.0
    %97 = vmatpush1.msra.mxu0 0.0
    %98 = vmatprep.subr.mxu0 0.0
    %99 = vmatpush1.msra.mxu0 0.0
    %100 = vmatprep.subr.mxu0 0.0
    %101 = vmatpush1.msra.mxu0 0.0
    %102 = vmatprep.subr.mxu0 0.0
    %103 = vmatpush1.msra.mxu0 0.0
    %104 = vmatprep.subr.mxu0 0.0
    %105 = vmatpush1.msra.mxu0 0.0
    %106 = vmatprep.subr.mxu0 0.0
    %107 = vmatpush1.msra.mxu0 0.0
    %108 = vmatprep.subr.mxu0 0.0
    %109 = vmatpush1.msra.mxu0 0.0
    %110 = vmatprep.subr.mxu0 0.0
    %111 = vmatpush1.msra.mxu0 0.0
    %112 = vmatprep.subr.mxu0 0.0
    %113 = vmatpush1.msra.mxu0 0.0
    %114 = vmatprep.subr.mxu0 0.0
    %115 = vmatpush1.msra.mxu0 0.0
    %116 = vmatprep.subr.mxu0 0.0
    %117 = vmatpush1.msra.mxu0 0.0
    %118 = vmatprep.subr.mxu0 0.0
    %119 = vmatpush1.msra.mxu0 0.0
    %120 = vmatprep.subr.mxu0 0.0
    %121 = vmatpush1.msra.mxu0 0.0
    %122 = vmatprep.subr.mxu0 0.0
    %123 = vmatpush1.msra.mxu0 0.0
    %124 = vmatprep.subr.mxu0 0.0
    %125 = vmatpush1.msra.mxu0 0.0
    %126 = vmatprep.subr.mxu0 0.0
    %127 = vmatpush1.msra.mxu0 0.0
    %128 = vmatprep.mubr.f32.mxu0 0.0
    %129 = vmatmul.mubr.f32.gmra.mrb[0].mxu0 %v62
    %v130 = vpop.f32.mrb[0].mxu0
    %v131 = vadd.f32 %v58, %v130
    %v132 = vpop.f32.mrb[0].mxu0
    %133 = vdwg.mxu0
    %v134 = vld [vmem:[%s4] sm:$0x1]
    %v135 = vld [vmem:[%s5] sm:$0x1]
    %vm136 = vcmask 261120
    %v138 = vsel %vm136, %v134, 0
    %140 = vmatprep.subr.mxu0 0.0
    %141 = vmatpush1.msra.mxu0 %v46
    %142 = vmatprep.subr.mxu0 0.0
    %143 = vmatpush1.msra.mxu0 %v47
    %144 = vmatprep.subr.mxu0 0.0
    %145 = vmatpush1.msra.mxu0 %v48
    %146 = vmatprep.subr.mxu0 0.0
    %147 = vmatpush1.msra.mxu0 %v49
    %148 = vmatprep.subr.mxu0 0.0
    %149 = vmatpush1.msra.mxu0 0.0
    %150 = vmatprep.subr.mxu0 0.0
    %151 = vmatpush1.msra.mxu0 0.0
    %152 = vmatprep.subr.mxu0 0.0
    %153 = vmatpush1.msra.mxu0 0.0
    %154 = vmatprep.subr.mxu0 0.0
    %155 = vmatpush1.msra.mxu0 0.0
    %156 = vmatprep.subr.mxu0 0.0
    %157 = vmatpush1.msra.mxu0 0.0
    %158 = vmatprep.subr.mxu0 0.0
    %159 = vmatpush1.msra.mxu0 0.0
    %160 = vmatprep.subr.mxu0 0.0
    %161 = vmatpush1.msra.mxu0 0.0
    %162 = vmatprep.subr.mxu0 0.0
    %163 = vmatpush1.msra.mxu0 0.0
    %164 = vmatprep.subr.mxu0 0.0
    %165 = vmatpush1.msra.mxu0 0.0
    %166 = vmatprep.subr.mxu0 0.0
    %167 = vmatpush1.msra.mxu0 0.0
    %168 = vmatprep.subr.mxu0 0.0
    %169 = vmatpush1.msra.mxu0 0.0
    %170 = vmatprep.subr.mxu0 0.0
    %171 = vmatpush1.msra.mxu0 0.0
    %172 = vmatprep.subr.mxu0 0.0
    %173 = vmatpush1.msra.mxu0 0.0
    %174 = vmatprep.subr.mxu0 0.0
    %175 = vmatpush1.msra.mxu0 0.0
    %176 = vmatprep.subr.mxu0 0.0
    %177 = vmatpush1.msra.mxu0 0.0
    %178 = vmatprep.subr.mxu0 0.0
    %179 = vmatpush1.msra.mxu0 0.0
    %180 = vmatprep.subr.mxu0 0.0
    %181 = vmatpush1.msra.mxu0 0.0
    %182 = vmatprep.subr.mxu0 0.0
    %183 = vmatpush1.msra.mxu0 0.0
    %184 = vmatprep.subr.mxu0 0.0
    %185 = vmatpush1.msra.mxu0 0.0
    %186 = vmatprep.subr.mxu0 0.0
    %187 = vmatpush1.msra.mxu0 0.0
    %188 = vmatprep.subr.mxu0 0.0
    %189 = vmatpush1.msra.mxu0 0.0
    %190 = vmatprep.subr.mxu0 0.0
    %191 = vmatpush1.msra.mxu0 0.0
    %192 = vmatprep.subr.mxu0 0.0
    %193 = vmatpush1.msra.mxu0 0.0
    %194 = vmatprep.subr.mxu0 0.0
    %195 = vmatpush1.msra.mxu0 0.0
    %196 = vmatprep.subr.mxu0 0.0
    %197 = vmatpush1.msra.mxu0 0.0
    %198 = vmatprep.subr.mxu0 0.0
    %199 = vmatpush1.msra.mxu0 0.0
    %200 = vmatprep.subr.mxu0 0.0
    %201 = vmatpush1.msra.mxu0 0.0
    %202 = vmatprep.subr.mxu0 0.0
    %203 = vmatpush1.msra.mxu0 0.0
    %204 = vmatprep.mubr.f32.mxu0 0.0
    %205 = vmatmul.mubr.f32.gmra.mrb[0].mxu0 %v138
    %v206 = vpop.f32.mrb[0].mxu0
    %v207 = vadd.f32 0.0, %v206
    %v208 = vpop.f32.mrb[0].mxu0
    %209 = vdwg.mxu0
    %v210 = vadd.f32 %v131, %v207
    %v211 = vxor.u32 %v210, 2147483648
    %v212 = vmul.f32 %v211, 1.442695
    %v213 = vpow.pop %v212
    %v214 = vadd.f32 %v213, 1.0
    %v215 = vrcp.pop %v214
    %v216 = vmul.f32 1.0, %v215
    %v217 = vtanh.pop %v210
    %v219 = vlaneseq
    %v220 = vshrl.u32 %v219, 7
    %v221 = vsub.s32 0, %v220
    %v222 = vrot.slane %v135, %v221
    %223 = vrot.lane.b32.xlu0 %v222, 32
    %v224 = vpop.permute.xlu0 %223
    %v226 = vmul.f32 %v216, %v224
    %228 = vrot.lane.b32.xlu0 %v217, 64
    %v229 = vpop.permute.xlu0 %228
    %v231 = vmul.f32 %v216, %v229
    %233 = vrot.lane.b32.xlu0 %v231, 32
    %v234 = vpop.permute.xlu0 %233
    %v236 = vadd.f32 %v226, %v234
    %v237 = vtanh.pop %v236
    %239 = vrot.lane.b32.xlu0 %v237, 64
    %v240 = vpop.permute.xlu0 %239
    %v242 = vmul.f32 %v216, %v240
    %244 = vrot.lane.b32.xlu0 %v242, 32
    %v245 = vpop.permute.xlu0 %244
    %v246 = vsel %vm136, %v245, 0
    %248 = vmatprep.subr.mxu0 0.0
    %249 = vmatpush1.msra.mxu0 %v46
    %250 = vmatprep.subr.mxu0 0.0
    %251 = vmatpush1.msra.mxu0 %v47
    %252 = vmatprep.subr.mxu0 0.0
    %253 = vmatpush1.msra.mxu0 %v48
    %254 = vmatprep.subr.mxu0 0.0
    %255 = vmatpush1.msra.mxu0 %v49
    %256 = vmatprep.subr.mxu0 0.0
    %257 = vmatpush1.msra.mxu0 0.0
    %258 = vmatprep.subr.mxu0 0.0
    %259 = vmatpush1.msra.mxu0 0.0
    %260 = vmatprep.subr.mxu0 0.0
    %261 = vmatpush1.msra.mxu0 0.0
    %262 = vmatprep.subr.mxu0 0.0
    %263 = vmatpush1.msra.mxu0 0.0
    %264 = vmatprep.subr.mxu0 0.0
    %265 = vmatpush1.msra.mxu0 0.0
    %266 = vmatprep.subr.mxu0 0.0
    %267 = vmatpush1.msra.mxu0 0.0
    %268 = vmatprep.subr.mxu0 0.0
    %269 = vmatpush1.msra.mxu0 0.0
    %270 = vmatprep.subr.mxu0 0.0
    %271 = vmatpush1.msra.mxu0 0.0
    %272 = vmatprep.subr.mxu0 0.0
    %273 = vmatpush1.msra.mxu0 0.0
    %274 = vmatprep.subr.mxu0 0.0
    %275 = vmatpush1.msra.mxu0 0.0
    %276 = vmatprep.subr.mxu0 0.0
    %277 = vmatpush1.msra.mxu0 0.0
    %278 = vmatprep.subr.mxu0 0.0
    %279 = vmatpush1.msra.mxu0 0.0
    %280 = vmatprep.subr.mxu0 0.0
    %281 = vmatpush1.msra.mxu0 0.0
    %282 = vmatprep.subr.mxu0 0.0
    %283 = vmatpush1.msra.mxu0 0.0
    %284 = vmatprep.subr.mxu0 0.0
    %285 = vmatpush1.msra.mxu0 0.0
    %286 = vmatprep.subr.mxu0 0.0
    %287 = vmatpush1.msra.mxu0 0.0
    %288 = vmatprep.subr.mxu0 0.0
    %289 = vmatpush1.msra.mxu0 0.0
    %290 = vmatprep.subr.mxu0 0.0
    %291 = vmatpush1.msra.mxu0 0.0
    %292 = vmatprep.subr.mxu0 0.0
    %293 = vmatpush1.msra.mxu0 0.0
    %294 = vmatprep.subr.mxu0 0.0
    %295 = vmatpush1.msra.mxu0 0.0
    %296 = vmatprep.subr.mxu0 0.0
    %297 = vmatpush1.msra.mxu0 0.0
    %298 = vmatprep.subr.mxu0 0.0
    %299 = vmatpush1.msra.mxu0 0.0
    %300 = vmatprep.subr.mxu0 0.0
    %301 = vmatpush1.msra.mxu0 0.0
    %302 = vmatprep.subr.mxu0 0.0
    %303 = vmatpush1.msra.mxu0 0.0
    %304 = vmatprep.subr.mxu0 0.0
    %305 = vmatpush1.msra.mxu0 0.0
    %306 = vmatprep.subr.mxu0 0.0
    %307 = vmatpush1.msra.mxu0 0.0
    %308 = vmatprep.subr.mxu0 0.0
    %309 = vmatpush1.msra.mxu0 0.0
    %310 = vmatprep.subr.mxu0 0.0
    %311 = vmatpush1.msra.mxu0 0.0
    %312 = vmatprep.mubr.f32.mxu0 0.0
    %313 = vmatmul.mubr.f32.gmra.mrb[0].mxu0 %v246
    %v314 = vpop.f32.mrb[0].mxu0
    %v315 = vadd.f32 0.0, %v314
    %v316 = vpop.f32.mrb[0].mxu0
    %317 = vdwg.mxu0
    %v319 = vrot.slane %v315, 7
    %v321 = vadd.f32 %v131, %v319
    %v322 = vxor.u32 %v321, 2147483648
    %v323 = vmul.f32 %v322, 1.442695
    %v324 = vpow.pop %v323
    %v325 = vadd.f32 %v324, 1.0
    %v326 = vrcp.pop %v325
    %v327 = vmul.f32 1.0, %v326
    %v328 = vtanh.pop %v321
    %v330 = vrot.slane %v236, 7
    %v332 = vmul.f32 %v327, %v330
    %334 = vrot.lane.b32.xlu0 %v328, 64
    %v335 = vpop.permute.xlu0 %334
    %v337 = vmul.f32 %v327, %v335
    %339 = vrot.lane.b32.xlu0 %v337, 32
    %v340 = vpop.permute.xlu0 %339
    %v342 = vadd.f32 %v332, %v340
    %v343 = vtanh.pop %v342
    %345 = vrot.lane.b32.xlu0 %v343, 64
    %v346 = vpop.permute.xlu0 %345
    %v348 = vmul.f32 %v327, %v346
    %v350 = vrot.slane %v348, 1
    %351 = vrot.lane.b32.xlu0 %v350, 32
    %v352 = vpop.permute.xlu0 %351
    %v353 = vsel %vm136, %v352, 0
    %355 = vmatprep.subr.mxu0 0.0
    %356 = vmatpush1.msra.mxu0 %v46
    %357 = vmatprep.subr.mxu0 0.0
    %358 = vmatpush1.msra.mxu0 %v47
    %359 = vmatprep.subr.mxu0 0.0
    %360 = vmatpush1.msra.mxu0 %v48
    %361 = vmatprep.subr.mxu0 0.0
    %362 = vmatpush1.msra.mxu0 %v49
    %363 = vmatprep.subr.mxu0 0.0
    %364 = vmatpush1.msra.mxu0 0.0
    %365 = vmatprep.subr.mxu0 0.0
    %366 = vmatpush1.msra.mxu0 0.0
    %367 = vmatprep.subr.mxu0 0.0
    %368 = vmatpush1.msra.mxu0 0.0
    %369 = vmatprep.subr.mxu0 0.0
    %370 = vmatpush1.msra.mxu0 0.0
    %371 = vmatprep.subr.mxu0 0.0
    %372 = vmatpush1.msra.mxu0 0.0
    %373 = vmatprep.subr.mxu0 0.0
    %374 = vmatpush1.msra.mxu0 0.0
    %375 = vmatprep.subr.mxu0 0.0
    %376 = vmatpush1.msra.mxu0 0.0
    %377 = vmatprep.subr.mxu0 0.0
    %378 = vmatpush1.msra.mxu0 0.0
    %379 = vmatprep.subr.mxu0 0.0
    %380 = vmatpush1.msra.mxu0 0.0
    %381 = vmatprep.subr.mxu0 0.0
    %382 = vmatpush1.msra.mxu0 0.0
    %383 = vmatprep.subr.mxu0 0.0
    %384 = vmatpush1.msra.mxu0 0.0
    %385 = vmatprep.subr.mxu0 0.0
    %386 = vmatpush1.msra.mxu0 0.0
    %387 = vmatprep.subr.mxu0 0.0
    %388 = vmatpush1.msra.mxu0 0.0
    %389 = vmatprep.subr.mxu0 0.0
    %390 = vmatpush1.msra.mxu0 0.0
    %391 = vmatprep.subr.mxu0 0.0
    %392 = vmatpush1.msra.mxu0 0.0
    %393 = vmatprep.subr.mxu0 0.0
    %394 = vmatpush1.msra.mxu0 0.0
    %395 = vmatprep.subr.mxu0 0.0
    %396 = vmatpush1.msra.mxu0 0.0
    %397 = vmatprep.subr.mxu0 0.0
    %398 = vmatpush1.msra.mxu0 0.0
    %399 = vmatprep.subr.mxu0 0.0
    %400 = vmatpush1.msra.mxu0 0.0
    %401 = vmatprep.subr.mxu0 0.0
    %402 = vmatpush1.msra.mxu0 0.0
    %403 = vmatprep.subr.mxu0 0.0
    %404 = vmatpush1.msra.mxu0 0.0
    %405 = vmatprep.subr.mxu0 0.0
    %406 = vmatpush1.msra.mxu0 0.0
    %407 = vmatprep.subr.mxu0 0.0
    %408 = vmatpush1.msra.mxu0 0.0
    %409 = vmatprep.subr.mxu0 0.0
    %410 = vmatpush1.msra.mxu0 0.0
    %411 = vmatprep.subr.mxu0 0.0
    %412 = vmatpush1.msra.mxu0 0.0
    %413 = vmatprep.subr.mxu0 0.0
    %414 = vmatpush1.msra.mxu0 0.0
    %415 = vmatprep.subr.mxu0 0.0
    %416 = vmatpush1.msra.mxu0 0.0
    %417 = vmatprep.subr.mxu0 0.0
    %418 = vmatpush1.msra.mxu0 0.0
    %419 = vmatprep.mubr.f32.mxu0 0.0
    %420 = vmatmul.mubr.f32.gmra.mrb[0].mxu0 %v353
    %v421 = vpop.f32.mrb[0].mxu0
    %v422 = vadd.f32 0.0, %v421
    %v423 = vpop.f32.mrb[0].mxu0
    %424 = vdwg.mxu0
    %v426 = vrot.slane %v422, 6
    %v428 = vadd.f32 %v131, %v426
    %v429 = vxor.u32 %v428, 2147483648
    %v430 = vmul.f32 %v429, 1.442695
    %v431 = vpow.pop %v430
    %v432 = vadd.f32 %v431, 1.0
    %v433 = vrcp.pop %v432
    %v434 = vmul.f32 1.0, %v433
    %v435 = vtanh.pop %v428
    %v437 = vrot.slane %v342, 7
    %v439 = vmul.f32 %v434, %v437
    %441 = vrot.lane.b32.xlu0 %v435, 64
    %v442 = vpop.permute.xlu0 %441
    %v444 = vmul.f32 %v434, %v442
    %446 = vrot.lane.b32.xlu0 %v444, 32
    %v447 = vpop.permute.xlu0 %446
    %v449 = vadd.f32 %v439, %v447
    %v450 = vtanh.pop %v449
    %452 = vrot.lane.b32.xlu0 %v450, 64
    %v453 = vpop.permute.xlu0 %452
    %v455 = vmul.f32 %v434, %v453
    %v457 = vrot.slane %v455, 2
    %458 = vrot.lane.b32.xlu0 %v457, 32
    %v459 = vpop.permute.xlu0 %458
    %v460 = vsel %vm136, %v459, 0
    %462 = vmatprep.subr.mxu0 0.0
    %463 = vmatpush1.msra.mxu0 %v46
    %464 = vmatprep.subr.mxu0 0.0
    %465 = vmatpush1.msra.mxu0 %v47
    %466 = vmatprep.subr.mxu0 0.0
    %467 = vmatpush1.msra.mxu0 %v48
    %468 = vmatprep.subr.mxu0 0.0
    %469 = vmatpush1.msra.mxu0 %v49
    %470 = vmatprep.subr.mxu0 0.0
    %471 = vmatpush1.msra.mxu0 0.0
    %472 = vmatprep.subr.mxu0 0.0
    %473 = vmatpush1.msra.mxu0 0.0
    %474 = vmatprep.subr.mxu0 0.0
    %475 = vmatpush1.msra.mxu0 0.0
    %476 = vmatprep.subr.mxu0 0.0
    %477 = vmatpush1.msra.mxu0 0.0
    %478 = vmatprep.subr.mxu0 0.0
    %479 = vmatpush1.msra.mxu0 0.0
    %480 = vmatprep.subr.mxu0 0.0
    %481 = vmatpush1.msra.mxu0 0.0
    %482 = vmatprep.subr.mxu0 0.0
    %483 = vmatpush1.msra.mxu0 0.0
    %484 = vmatprep.subr.mxu0 0.0
    %485 = vmatpush1.msra.mxu0 0.0
    %486 = vmatprep.subr.mxu0 0.0
    %487 = vmatpush1.msra.mxu0 0.0
    %488 = vmatprep.subr.mxu0 0.0
    %489 = vmatpush1.msra.mxu0 0.0
    %490 = vmatprep.subr.mxu0 0.0
    %491 = vmatpush1.msra.mxu0 0.0
    %492 = vmatprep.subr.mxu0 0.0
    %493 = vmatpush1.msra.mxu0 0.0
    %494 = vmatprep.subr.mxu0 0.0
    %495 = vmatpush1.msra.mxu0 0.0
    %496 = vmatprep.subr.mxu0 0.0
    %497 = vmatpush1.msra.mxu0 0.0
    %498 = vmatprep.subr.mxu0 0.0
    %499 = vmatpush1.msra.mxu0 0.0
    %500 = vmatprep.subr.mxu0 0.0
    %501 = vmatpush1.msra.mxu0 0.0
    %502 = vmatprep.subr.mxu0 0.0
    %503 = vmatpush1.msra.mxu0 0.0
    %504 = vmatprep.subr.mxu0 0.0
    %505 = vmatpush1.msra.mxu0 0.0
    %506 = vmatprep.subr.mxu0 0.0
    %507 = vmatpush1.msra.mxu0 0.0
    %508 = vmatprep.subr.mxu0 0.0
    %509 = vmatpush1.msra.mxu0 0.0
    %510 = vmatprep.subr.mxu0 0.0
    %511 = vmatpush1.msra.mxu0 0.0
    %512 = vmatprep.subr.mxu0 0.0
    %513 = vmatpush1.msra.mxu0 0.0
    %514 = vmatprep.subr.mxu0 0.0
    %515 = vmatpush1.msra.mxu0 0.0
    %516 = vmatprep.subr.mxu0 0.0
    %517 = vmatpush1.msra.mxu0 0.0
    %518 = vmatprep.subr.mxu0 0.0
    %519 = vmatpush1.msra.mxu0 0.0
    %520 = vmatprep.subr.mxu0 0.0
    %521 = vmatpush1.msra.mxu0 0.0
    %522 = vmatprep.subr.mxu0 0.0
    %523 = vmatpush1.msra.mxu0 0.0
    %524 = vmatprep.subr.mxu0 0.0
    %525 = vmatpush1.msra.mxu0 0.0
    %526 = vmatprep.mubr.f32.mxu0 0.0
    %527 = vmatmul.mubr.f32.gmra.mrb[0].mxu0 %v460
    %v528 = vpop.f32.mrb[0].mxu0
    %v529 = vadd.f32 0.0, %v528
    %v530 = vpop.f32.mrb[0].mxu0
    %531 = vdwg.mxu0
    %v533 = vrot.slane %v529, 5
    %v535 = vadd.f32 %v131, %v533
    %v536 = vxor.u32 %v535, 2147483648
    %v537 = vmul.f32 %v536, 1.442695
    %v538 = vpow.pop %v537
    %v539 = vadd.f32 %v538, 1.0
    %v540 = vrcp.pop %v539
    %v541 = vmul.f32 1.0, %v540
    %v542 = vtanh.pop %v535
    %v544 = vrot.slane %v449, 7
    %v546 = vmul.f32 %v541, %v544
    %548 = vrot.lane.b32.xlu0 %v542, 64
    %v549 = vpop.permute.xlu0 %548
    %v551 = vmul.f32 %v541, %v549
    %553 = vrot.lane.b32.xlu0 %v551, 32
    %v554 = vpop.permute.xlu0 %553
    %v556 = vadd.f32 %v546, %v554
    %v557 = vtanh.pop %v556
    %559 = vrot.lane.b32.xlu0 %v557, 64
    %v560 = vpop.permute.xlu0 %559
    %v562 = vmul.f32 %v541, %v560
    %v564 = vrot.slane %v562, 3
    %565 = vrot.lane.b32.xlu0 %v564, 32
    %v566 = vpop.permute.xlu0 %565
    %v567 = vsel %vm136, %v566, 0
    %569 = vmatprep.subr.mxu0 0.0
    %570 = vmatpush1.msra.mxu0 %v46
    %571 = vmatprep.subr.mxu0 0.0
    %572 = vmatpush1.msra.mxu0 %v47
    %573 = vmatprep.subr.mxu0 0.0
    %574 = vmatpush1.msra.mxu0 %v48
    %575 = vmatprep.subr.mxu0 0.0
    %576 = vmatpush1.msra.mxu0 %v49
    %577 = vmatprep.subr.mxu0 0.0
    %578 = vmatpush1.msra.mxu0 0.0
    %579 = vmatprep.subr.mxu0 0.0
    %580 = vmatpush1.msra.mxu0 0.0
    %581 = vmatprep.subr.mxu0 0.0
    %582 = vmatpush1.msra.mxu0 0.0
    %583 = vmatprep.subr.mxu0 0.0
    %584 = vmatpush1.msra.mxu0 0.0
    %585 = vmatprep.subr.mxu0 0.0
    %586 = vmatpush1.msra.mxu0 0.0
    %587 = vmatprep.subr.mxu0 0.0
    %588 = vmatpush1.msra.mxu0 0.0
    %589 = vmatprep.subr.mxu0 0.0
    %590 = vmatpush1.msra.mxu0 0.0
    %591 = vmatprep.subr.mxu0 0.0
    %592 = vmatpush1.msra.mxu0 0.0
    %593 = vmatprep.subr.mxu0 0.0
    %594 = vmatpush1.msra.mxu0 0.0
    %595 = vmatprep.subr.mxu0 0.0
    %596 = vmatpush1.msra.mxu0 0.0
    %597 = vmatprep.subr.mxu0 0.0
    %598 = vmatpush1.msra.mxu0 0.0
    %599 = vmatprep.subr.mxu0 0.0
    %600 = vmatpush1.msra.mxu0 0.0
    %601 = vmatprep.subr.mxu0 0.0
    %602 = vmatpush1.msra.mxu0 0.0
    %603 = vmatprep.subr.mxu0 0.0
    %604 = vmatpush1.msra.mxu0 0.0
    %605 = vmatprep.subr.mxu0 0.0
    %606 = vmatpush1.msra.mxu0 0.0
    %607 = vmatprep.subr.mxu0 0.0
    %608 = vmatpush1.msra.mxu0 0.0
    %609 = vmatprep.subr.mxu0 0.0
    %610 = vmatpush1.msra.mxu0 0.0
    %611 = vmatprep.subr.mxu0 0.0
    %612 = vmatpush1.msra.mxu0 0.0
    %613 = vmatprep.subr.mxu0 0.0
    %614 = vmatpush1.msra.mxu0 0.0
    %615 = vmatprep.subr.mxu0 0.0
    %616 = vmatpush1.msra.mxu0 0.0
    %617 = vmatprep.subr.mxu0 0.0
    %618 = vmatpush1.msra.mxu0 0.0
    %619 = vmatprep.subr.mxu0 0.0
    %620 = vmatpush1.msra.mxu0 0.0
    %621 = vmatprep.subr.mxu0 0.0
    %622 = vmatpush1.msra.mxu0 0.0
    %623 = vmatprep.subr.mxu0 0.0
    %624 = vmatpush1.msra.mxu0 0.0
    %625 = vmatprep.subr.mxu0 0.0
    %626 = vmatpush1.msra.mxu0 0.0
    %627 = vmatprep.subr.mxu0 0.0
    %628 = vmatpush1.msra.mxu0 0.0
    %629 = vmatprep.subr.mxu0 0.0
    %630 = vmatpush1.msra.mxu0 0.0
    %631 = vmatprep.subr.mxu0 0.0
    %632 = vmatpush1.msra.mxu0 0.0
    %633 = vmatprep.mubr.f32.mxu0 0.0
    %634 = vmatmul.mubr.f32.gmra.mrb[0].mxu0 %v567
    %v635 = vpop.f32.mrb[0].mxu0
    %v636 = vadd.f32 0.0, %v635
    %v637 = vpop.f32.mrb[0].mxu0
    %638 = vdwg.mxu0
    %v640 = vrot.slane %v636, 4
    %v642 = vadd.f32 %v131, %v640
    %v643 = vxor.u32 %v642, 2147483648
    %v644 = vmul.f32 %v643, 1.442695
    %v645 = vpow.pop %v644
    %v646 = vadd.f32 %v645, 1.0
    %v647 = vrcp.pop %v646
    %v648 = vmul.f32 1.0, %v647
    %v649 = vtanh.pop %v642
    %v651 = vrot.slane %v556, 7
    %v653 = vmul.f32 %v648, %v651
    %655 = vrot.lane.b32.xlu0 %v649, 64
    %v656 = vpop.permute.xlu0 %655
    %v658 = vmul.f32 %v648, %v656
    %660 = vrot.lane.b32.xlu0 %v658, 32
    %v661 = vpop.permute.xlu0 %660
    %v663 = vadd.f32 %v653, %v661
    %v664 = vtanh.pop %v663
    %666 = vrot.lane.b32.xlu0 %v664, 64
    %v667 = vpop.permute.xlu0 %666
    %v669 = vmul.f32 %v648, %v667
    %v671 = vrot.slane %v669, 4
    %672 = vrot.lane.b32.xlu0 %v671, 32
    %v673 = vpop.permute.xlu0 %672
    %v674 = vsel %vm136, %v673, 0
    %676 = vmatprep.subr.mxu0 0.0
    %677 = vmatpush1.msra.mxu0 %v46
    %678 = vmatprep.subr.mxu0 0.0
    %679 = vmatpush1.msra.mxu0 %v47
    %680 = vmatprep.subr.mxu0 0.0
    %681 = vmatpush1.msra.mxu0 %v48
    %682 = vmatprep.subr.mxu0 0.0
    %683 = vmatpush1.msra.mxu0 %v49
    %684 = vmatprep.subr.mxu0 0.0
    %685 = vmatpush1.msra.mxu0 0.0
    %686 = vmatprep.subr.mxu0 0.0
    %687 = vmatpush1.msra.mxu0 0.0
    %688 = vmatprep.subr.mxu0 0.0
    %689 = vmatpush1.msra.mxu0 0.0
    %690 = vmatprep.subr.mxu0 0.0
    %691 = vmatpush1.msra.mxu0 0.0
    %692 = vmatprep.subr.mxu0 0.0
    %693 = vmatpush1.msra.mxu0 0.0
    %694 = vmatprep.subr.mxu0 0.0
    %695 = vmatpush1.msra.mxu0 0.0
    %696 = vmatprep.subr.mxu0 0.0
    %697 = vmatpush1.msra.mxu0 0.0
    %698 = vmatprep.subr.mxu0 0.0
    %699 = vmatpush1.msra.mxu0 0.0
    %700 = vmatprep.subr.mxu0 0.0
    %701 = vmatpush1.msra.mxu0 0.0
    %702 = vmatprep.subr.mxu0 0.0
    %703 = vmatpush1.msra.mxu0 0.0
    %704 = vmatprep.subr.mxu0 0.0
    %705 = vmatpush1.msra.mxu0 0.0
    %706 = vmatprep.subr.mxu0 0.0
    %707 = vmatpush1.msra.mxu0 0.0
    %708 = vmatprep.subr.mxu0 0.0
    %709 = vmatpush1.msra.mxu0 0.0
    %710 = vmatprep.subr.mxu0 0.0
    %711 = vmatpush1.msra.mxu0 0.0
    %712 = vmatprep.subr.mxu0 0.0
    %713 = vmatpush1.msra.mxu0 0.0
    %714 = vmatprep.subr.mxu0 0.0
    %715 = vmatpush1.msra.mxu0 0.0
    %716 = vmatprep.subr.mxu0 0.0
    %717 = vmatpush1.msra.mxu0 0.0
    %718 = vmatprep.subr.mxu0 0.0
    %719 = vmatpush1.msra.mxu0 0.0
    %720 = vmatprep.subr.mxu0 0.0
    %721 = vmatpush1.msra.mxu0 0.0
    %722 = vmatprep.subr.mxu0 0.0
    %723 = vmatpush1.msra.mxu0 0.0
    %724 = vmatprep.subr.mxu0 0.0
    %725 = vmatpush1.msra.mxu0 0.0
    %726 = vmatprep.subr.mxu0 0.0
    %727 = vmatpush1.msra.mxu0 0.0
    %728 = vmatprep.subr.mxu0 0.0
    %729 = vmatpush1.msra.mxu0 0.0
    %730 = vmatprep.subr.mxu0 0.0
    %731 = vmatpush1.msra.mxu0 0.0
    %732 = vmatprep.subr.mxu0 0.0
    %733 = vmatpush1.msra.mxu0 0.0
    %734 = vmatprep.subr.mxu0 0.0
    %735 = vmatpush1.msra.mxu0 0.0
    %736 = vmatprep.subr.mxu0 0.0
    %737 = vmatpush1.msra.mxu0 0.0
    %738 = vmatprep.subr.mxu0 0.0
    %739 = vmatpush1.msra.mxu0 0.0
    %740 = vmatprep.mubr.f32.mxu0 0.0
    %741 = vmatmul.mubr.f32.gmra.mrb[0].mxu0 %v674
    %v742 = vpop.f32.mrb[0].mxu0
    %v743 = vadd.f32 0.0, %v742
    %v744 = vpop.f32.mrb[0].mxu0
    %745 = vdwg.mxu0
    %v747 = vrot.slane %v743, 3
    %v749 = vadd.f32 %v131, %v747
    %v750 = vxor.u32 %v749, 2147483648
    %v751 = vmul.f32 %v750, 1.442695
    %v752 = vpow.pop %v751
    %v753 = vadd.f32 %v752, 1.0
    %v754 = vrcp.pop %v753
    %v755 = vmul.f32 1.0, %v754
    %v756 = vtanh.pop %v749
    %v758 = vrot.slane %v663, 7
    %v760 = vmul.f32 %v755, %v758
    %762 = vrot.lane.b32.xlu0 %v756, 64
    %v763 = vpop.permute.xlu0 %762
    %v765 = vmul.f32 %v755, %v763
    %767 = vrot.lane.b32.xlu0 %v765, 32
    %v768 = vpop.permute.xlu0 %767
    %v770 = vadd.f32 %v760, %v768
    %v771 = vtanh.pop %v770
    %773 = vrot.lane.b32.xlu0 %v771, 64
    %v774 = vpop.permute.xlu0 %773
    %v776 = vmul.f32 %v755, %v774
    %v778 = vrot.slane %v776, 5
    %779 = vrot.lane.b32.xlu0 %v778, 32
    %v780 = vpop.permute.xlu0 %779
    %v781 = vsel %vm136, %v780, 0
    %783 = vmatprep.subr.mxu0 0.0
    %784 = vmatpush1.msra.mxu0 %v46
    %785 = vmatprep.subr.mxu0 0.0
    %786 = vmatpush1.msra.mxu0 %v47
    %787 = vmatprep.subr.mxu0 0.0
    %788 = vmatpush1.msra.mxu0 %v48
    %789 = vmatprep.subr.mxu0 0.0
    %790 = vmatpush1.msra.mxu0 %v49
    %791 = vmatprep.subr.mxu0 0.0
    %792 = vmatpush1.msra.mxu0 0.0
    %793 = vmatprep.subr.mxu0 0.0
    %794 = vmatpush1.msra.mxu0 0.0
    %795 = vmatprep.subr.mxu0 0.0
    %796 = vmatpush1.msra.mxu0 0.0
    %797 = vmatprep.subr.mxu0 0.0
    %798 = vmatpush1.msra.mxu0 0.0
    %799 = vmatprep.subr.mxu0 0.0
    %800 = vmatpush1.msra.mxu0 0.0
    %801 = vmatprep.subr.mxu0 0.0
    %802 = vmatpush1.msra.mxu0 0.0
    %803 = vmatprep.subr.mxu0 0.0
    %804 = vmatpush1.msra.mxu0 0.0
    %805 = vmatprep.subr.mxu0 0.0
    %806 = vmatpush1.msra.mxu0 0.0
    %807 = vmatprep.subr.mxu0 0.0
    %808 = vmatpush1.msra.mxu0 0.0
    %809 = vmatprep.subr.mxu0 0.0
    %810 = vmatpush1.msra.mxu0 0.0
    %811 = vmatprep.subr.mxu0 0.0
    %812 = vmatpush1.msra.mxu0 0.0
    %813 = vmatprep.subr.mxu0 0.0
    %814 = vmatpush1.msra.mxu0 0.0
    %815 = vmatprep.subr.mxu0 0.0
    %816 = vmatpush1.msra.mxu0 0.0
    %817 = vmatprep.subr.mxu0 0.0
    %818 = vmatpush1.msra.mxu0 0.0
    %819 = vmatprep.subr.mxu0 0.0
    %820 = vmatpush1.msra.mxu0 0.0
    %821 = vmatprep.subr.mxu0 0.0
    %822 = vmatpush1.msra.mxu0 0.0
    %823 = vmatprep.subr.mxu0 0.0
    %824 = vmatpush1.msra.mxu0 0.0
    %825 = vmatprep.subr.mxu0 0.0
    %826 = vmatpush1.msra.mxu0 0.0
    %827 = vmatprep.subr.mxu0 0.0
    %828 = vmatpush1.msra.mxu0 0.0
    %829 = vmatprep.subr.mxu0 0.0
    %830 = vmatpush1.msra.mxu0 0.0
    %831 = vmatprep.subr.mxu0 0.0
    %832 = vmatpush1.msra.mxu0 0.0
    %833 = vmatprep.subr.mxu0 0.0
    %834 = vmatpush1.msra.mxu0 0.0
    %835 = vmatprep.subr.mxu0 0.0
    %836 = vmatpush1.msra.mxu0 0.0
    %837 = vmatprep.subr.mxu0 0.0
    %838 = vmatpush1.msra.mxu0 0.0
    %839 = vmatprep.subr.mxu0 0.0
    %840 = vmatpush1.msra.mxu0 0.0
    %841 = vmatprep.subr.mxu0 0.0
    %842 = vmatpush1.msra.mxu0 0.0
    %843 = vmatprep.subr.mxu0 0.0
    %844 = vmatpush1.msra.mxu0 0.0
    %845 = vmatprep.subr.mxu0 0.0
    %846 = vmatpush1.msra.mxu0 0.0
    %847 = vmatprep.mubr.f32.mxu0 0.0
    %848 = vmatmul.mubr.f32.gmra.mrb[0].mxu0 %v781
    %v849 = vpop.f32.mrb[0].mxu0
    %v850 = vadd.f32 0.0, %v849
    %v851 = vpop.f32.mrb[0].mxu0
    %852 = vdwg.mxu0
    %v854 = vrot.slane %v850, 2
    %v856 = vadd.f32 %v131, %v854
    %v857 = vxor.u32 %v856, 2147483648
    %v858 = vmul.f32 %v857, 1.442695
    %v859 = vpow.pop %v858
    %v860 = vadd.f32 %v859, 1.0
    %v861 = vrcp.pop %v860
    %v862 = vmul.f32 1.0, %v861
    %v863 = vtanh.pop %v856
    %v865 = vrot.slane %v770, 7
    %v867 = vmul.f32 %v862, %v865
    %869 = vrot.lane.b32.xlu0 %v863, 64
    %v870 = vpop.permute.xlu0 %869
    %v872 = vmul.f32 %v862, %v870
    %874 = vrot.lane.b32.xlu0 %v872, 32
    %v875 = vpop.permute.xlu0 %874
    %v877 = vadd.f32 %v867, %v875
    %v878 = vtanh.pop %v877
    %880 = vrot.lane.b32.xlu0 %v878, 64
    %v881 = vpop.permute.xlu0 %880
    %v883 = vmul.f32 %v862, %v881
    %v885 = vrot.slane %v883, 6
    %886 = vrot.lane.b32.xlu0 %v885, 32
    %v887 = vpop.permute.xlu0 %886
    %v888 = vsel %vm136, %v887, 0
    %890 = vmatprep.subr.mxu0 0.0
    %891 = vmatpush1.msra.mxu0 %v46
    %892 = vmatprep.subr.mxu0 0.0
    %893 = vmatpush1.msra.mxu0 %v47
    %894 = vmatprep.subr.mxu0 0.0
    %895 = vmatpush1.msra.mxu0 %v48
    %896 = vmatprep.subr.mxu0 0.0
    %897 = vmatpush1.msra.mxu0 %v49
    %898 = vmatprep.subr.mxu0 0.0
    %899 = vmatpush1.msra.mxu0 0.0
    %900 = vmatprep.subr.mxu0 0.0
    %901 = vmatpush1.msra.mxu0 0.0
    %902 = vmatprep.subr.mxu0 0.0
    %903 = vmatpush1.msra.mxu0 0.0
    %904 = vmatprep.subr.mxu0 0.0
    %905 = vmatpush1.msra.mxu0 0.0
    %906 = vmatprep.subr.mxu0 0.0
    %907 = vmatpush1.msra.mxu0 0.0
    %908 = vmatprep.subr.mxu0 0.0
    %909 = vmatpush1.msra.mxu0 0.0
    %910 = vmatprep.subr.mxu0 0.0
    %911 = vmatpush1.msra.mxu0 0.0
    %912 = vmatprep.subr.mxu0 0.0
    %913 = vmatpush1.msra.mxu0 0.0
    %914 = vmatprep.subr.mxu0 0.0
    %915 = vmatpush1.msra.mxu0 0.0
    %916 = vmatprep.subr.mxu0 0.0
    %917 = vmatpush1.msra.mxu0 0.0
    %918 = vmatprep.subr.mxu0 0.0
    %919 = vmatpush1.msra.mxu0 0.0
    %920 = vmatprep.subr.mxu0 0.0
    %921 = vmatpush1.msra.mxu0 0.0
    %922 = vmatprep.subr.mxu0 0.0
    %923 = vmatpush1.msra.mxu0 0.0
    %924 = vmatprep.subr.mxu0 0.0
    %925 = vmatpush1.msra.mxu0 0.0
    %926 = vmatprep.subr.mxu0 0.0
    %927 = vmatpush1.msra.mxu0 0.0
    %928 = vmatprep.subr.mxu0 0.0
    %929 = vmatpush1.msra.mxu0 0.0
    %930 = vmatprep.subr.mxu0 0.0
    %931 = vmatpush1.msra.mxu0 0.0
    %932 = vmatprep.subr.mxu0 0.0
    %933 = vmatpush1.msra.mxu0 0.0
    %934 = vmatprep.subr.mxu0 0.0
    %935 = vmatpush1.msra.mxu0 0.0
    %936 = vmatprep.subr.mxu0 0.0
    %937 = vmatpush1.msra.mxu0 0.0
    %938 = vmatprep.subr.mxu0 0.0
    %939 = vmatpush1.msra.mxu0 0.0
    %940 = vmatprep.subr.mxu0 0.0
    %941 = vmatpush1.msra.mxu0 0.0
    %942 = vmatprep.subr.mxu0 0.0
    %943 = vmatpush1.msra.mxu0 0.0
    %944 = vmatprep.subr.mxu0 0.0
    %945 = vmatpush1.msra.mxu0 0.0
    %946 = vmatprep.subr.mxu0 0.0
    %947 = vmatpush1.msra.mxu0 0.0
    %948 = vmatprep.subr.mxu0 0.0
    %949 = vmatpush1.msra.mxu0 0.0
    %950 = vmatprep.subr.mxu0 0.0
    %951 = vmatpush1.msra.mxu0 0.0
    %952 = vmatprep.subr.mxu0 0.0
    %953 = vmatpush1.msra.mxu0 0.0
    %954 = vmatprep.mubr.f32.mxu0 0.0
    %955 = vmatmul.mubr.f32.gmra.mrb[0].mxu0 %v888
    %v956 = vpop.f32.mrb[0].mxu0
    %v957 = vadd.f32 0.0, %v956
    %v958 = vpop.f32.mrb[0].mxu0
    %959 = vdwg.mxu0
    %v961 = vrot.slane %v957, 1
    %v963 = vadd.f32 %v131, %v961
    %v964 = vxor.u32 %v963, 2147483648
    %v965 = vmul.f32 %v964, 1.442695
    %v966 = vpow.pop %v965
    %v967 = vadd.f32 %v966, 1.0
    %v968 = vrcp.pop %v967
    %v969 = vmul.f32 1.0, %v968
    %v970 = vtanh.pop %v963
    %v972 = vrot.slane %v877, 7
    %v974 = vmul.f32 %v969, %v972
    %976 = vrot.lane.b32.xlu0 %v970, 64
    %v977 = vpop.permute.xlu0 %976
    %v979 = vmul.f32 %v969, %v977
    %981 = vrot.lane.b32.xlu0 %v979, 32
    %v982 = vpop.permute.xlu0 %981
    %v984 = vadd.f32 %v974, %v982
    %v985 = vtanh.pop %v984
    %987 = vrot.lane.b32.xlu0 %v985, 64
    %v988 = vpop.permute.xlu0 %987
    %v990 = vmul.f32 %v969, %v988
    %992 = vrot.lane.b32.xlu0 %v990, 32
    %v993 = vpop.permute.xlu0 %992
    %vm995 = vcmask 261127
    %996 = vst.msk [vmem:[#allocation6 - $0x7] sm:$0x80] %vm995, %v993
    %998 = vrot.lane.b32.xlu0 %v984, 96
    %v999 = vpop.permute.xlu0 %998
    %1001 = vst.msk [vmem:[#allocation8 - $0x7] sm:$0x80] %vm995, %v999
    %v1002 = vld [vmem:[%s6] sm:$0xff]
    %v1003 = vld [vmem:[%s6 + $0x8] sm:$0xff]
    %v1004 = vld [vmem:[%s6 + $0x10] sm:$0xff]
    %v1005 = vld [vmem:[%s6 + $0x18] sm:$0xff]
    %v1006 = vld [vmem:[%s7] sm:$0x1]
    %v1007 = vrot.slane %v990, 7
    %1008 = vrot.lane.b32.xlu0 %v1007, 32
    %v1009 = vpop.permute.xlu0 %1008
    %v1010 = vsel %vm136, %v1009, 0
    %1012 = vmatprep.subr.mxu0 0.0
    %1013 = vmatpush1.msra.mxu0 %v1002
    %1014 = vmatprep.subr.mxu0 0.0
    %1015 = vmatpush1.msra.mxu0 %v1003
    %1016 = vmatprep.subr.mxu0 0.0
    %1017 = vmatpush1.msra.mxu0 %v1004
    %1018 = vmatprep.subr.mxu0 0.0
    %1019 = vmatpush1.msra.mxu0 %v1005
    %1020 = vmatprep.subr.mxu0 0.0
    %1021 = vmatpush1.msra.mxu0 0.0
    %1022 = vmatprep.subr.mxu0 0.0
    %1023 = vmatpush1.msra.mxu0 0.0
    %1024 = vmatprep.subr.mxu0 0.0
    %1025 = vmatpush1.msra.mxu0 0.0
    %1026 = vmatprep.subr.mxu0 0.0
    %1027 = vmatpush1.msra.mxu0 0.0
    %1028 = vmatprep.subr.mxu0 0.0
    %1029 = vmatpush1.msra.mxu0 0.0
    %1030 = vmatprep.subr.mxu0 0.0
    %1031 = vmatpush1.msra.mxu0 0.0
    %1032 = vmatprep.subr.mxu0 0.0
    %1033 = vmatpush1.msra.mxu0 0.0
    %1034 = vmatprep.subr.mxu0 0.0
    %1035 = vmatpush1.msra.mxu0 0.0
    %1036 = vmatprep.subr.mxu0 0.0
    %1037 = vmatpush1.msra.mxu0 0.0
    %1038 = vmatprep.subr.mxu0 0.0
    %1039 = vmatpush1.msra.mxu0 0.0
    %1040 = vmatprep.subr.mxu0 0.0
    %1041 = vmatpush1.msra.mxu0 0.0
    %1042 = vmatprep.subr.mxu0 0.0
    %1043 = vmatpush1.msra.mxu0 0.0
    %1044 = vmatprep.subr.mxu0 0.0
    %1045 = vmatpush1.msra.mxu0 0.0
    %1046 = vmatprep.subr.mxu0 0.0
    %1047 = vmatpush1.msra.mxu0 0.0
    %1048 = vmatprep.subr.mxu0 0.0
    %1049 = vmatpush1.msra.mxu0 0.0
    %1050 = vmatprep.subr.mxu0 0.0
    %1051 = vmatpush1.msra.mxu0 0.0
    %1052 = vmatprep.subr.mxu0 0.0
    %1053 = vmatpush1.msra.mxu0 0.0
    %1054 = vmatprep.subr.mxu0 0.0
    %1055 = vmatpush1.msra.mxu0 0.0
    %1056 = vmatprep.subr.mxu0 0.0
    %1057 = vmatpush1.msra.mxu0 0.0
    %1058 = vmatprep.subr.mxu0 0.0
    %1059 = vmatpush1.msra.mxu0 0.0
    %1060 = vmatprep.subr.mxu0 0.0
    %1061 = vmatpush1.msra.mxu0 0.0
    %1062 = vmatprep.subr.mxu0 0.0
    %1063 = vmatpush1.msra.mxu0 0.0
    %1064 = vmatprep.subr.mxu0 0.0
    %1065 = vmatpush1.msra.mxu0 0.0
    %1066 = vmatprep.subr.mxu0 0.0
    %1067 = vmatpush1.msra.mxu0 0.0
    %1068 = vmatprep.subr.mxu0 0.0
    %1069 = vmatpush1.msra.mxu0 0.0
    %1070 = vmatprep.subr.mxu0 0.0
    %1071 = vmatpush1.msra.mxu0 0.0
    %1072 = vmatprep.subr.mxu0 0.0
    %1073 = vmatpush1.msra.mxu0 0.0
    %1074 = vmatprep.subr.mxu0 0.0
    %1075 = vmatpush1.msra.mxu0 0.0
    %1076 = vmatprep.mubr.f32.mxu0 0.0
    %1077 = vmatmul.mubr.f32.gmra.mrb[0].mxu0 %v1010
    %v1078 = vpop.f32.mrb[0].mxu0
    %v1079 = vadd.f32 %v1006, %v1078
    %v1080 = vpop.f32.mrb[0].mxu0
    %1081 = vdwg.mxu0
    %vm1082 = vcmask 73728
    %v1083 = vsel %vm1082, %v1079, -inf
    %1084 = vmax.xlane.f32.xlu0 %v1083
    %v1085 = vpop.xlane.xlu0 %1084
    %v1086 = vsub.f32 %v1079, %v1085
    %v1087 = vmul.f32 %v1086, 1.442695
    %v1088 = vpow.pop %v1087
    %v1089 = vsel %vm1082, %v1088, 0.0
    %1090 = vadd.xlane.f32.xlu0 %v1089
    %v1091 = vpop.xlane.xlu0 %1090
    %v1092 = vlog2.pop %v1091
    %v1093 = vmul.f32 %v1092, 0.6931472
    %v1094 = vsub.f32 %v1086, %v1093
    %1095 = vst.msk [vmem:[#allocation5] sm:$0x1] %vm1082, %v1094
    // Predicated region
    $region38: #{lstm_forward.1} parent=1 // pred_check
      _
    $region39: #{lstm_forward.1} parent=1 // pred_check_branch
      %1097 = sbr.rel (0) target = $region41
    $region40: #{lstm_forward.1} parent=1 // pred_region
      %s1099 = ssub.s32 16, 16
      %1100 = vsyncadd [#allocation4], %s1099
      %s1102 = sshll.u32 [#allocation5], 4
      %s1103 = int_to_ptr.vmem [resolvable:$true] %s1102
      %1105 = dma.vmem_to_hbm [thread:$0]  %s1103, 16, %s8, [#allocation4]
    $region41: #{lstm_forward.1} parent=1 // pred_fallthru
      _
    // Predicated region
    $region42: #{lstm_forward.1} parent=1 // pred_check
      _
    $region43: #{lstm_forward.1} parent=1 // pred_check_branch
      %1107 = sbr.rel (0) target = $region45
    $region44: #{lstm_forward.1} parent=1 // pred_region
      %s1109 = ssub.s32 16, 16
      %1110 = vsyncadd [#allocation7], %s1109
      %s1112 = sshll.u32 [#allocation6], 4
      %s1113 = int_to_ptr.vmem [resolvable:$true] %s1112
      %1115 = dma.vmem_to_hbm [thread:$0]  %s1113, 16, %s9, [#allocation7]
    $region45: #{lstm_forward.1} parent=1 // pred_fallthru
      _
    // Predicated region
    $region46: #{lstm_forward.1} parent=1 // pred_check
      _
    $region47: #{lstm_forward.1} parent=1 // pred_check_branch
      %1117 = sbr.rel (0) target = $region49
    $region48: #{lstm_forward.1} parent=1 // pred_region
      %s1119 = ssub.s32 16, 16
      %1120 = vsyncadd [#allocation7], %s1119
      %s1122 = sshll.u32 [#allocation8], 4
      %s1123 = int_to_ptr.vmem [resolvable:$true] %s1122
      %1125 = dma.vmem_to_hbm [thread:$0]  %s1123, 16, %s10, [#allocation7]
    $region49: #{lstm_forward.1} parent=1 // pred_fallthru
      _
    // Predicated region
    $region50: #{lstm_forward.1} parent=1 // pred_check
      _
    $region51: #{lstm_forward.1} parent=1 // pred_check_branch
      %1127 = sbr.rel (0) target = $region53
    $region52: #{lstm_forward.1} parent=1 // pred_region
      %1128 = dma.done [#allocation4], 16
    $region53: #{lstm_forward.1} parent=1 // pred_fallthru
      _
    // Predicated region
    $region54: #{lstm_forward.1} parent=1 // pred_check
      _
    $region55: #{lstm_forward.1} parent=1 // pred_check_branch
      %1130 = sbr.rel (0) target = $region57
    $region56: #{lstm_forward.1} parent=1 // pred_region
      %1131 = dma.done [#allocation7], 16
    $region57: #{lstm_forward.1} parent=1 // pred_fallthru
      _
    // Predicated region
    $region58: #{lstm_forward.1} parent=1 // pred_check
      _
    $region59: #{lstm_forward.1} parent=1 // pred_check_branch
      %1133 = sbr.rel (0) target = $region61
    $region60: #{lstm_forward.1} parent=1 // pred_region
      %1134 = dma.done [#allocation7], 16
    $region61: #{lstm_forward.1} parent=1 // pred_fallthru
      _
    %1135 = vsyncpa [#allocation3], 1
    %1136 = vsyncpa [#allocation4], 1
    %1137 = vsyncpa [#allocation7], 1

</llo_original>
